<compile_context>
chip_gen: v7x
topology: tpu7x:2x2x1
jax: 0.10.0
libtpu: 0.0.40
codegen_flags: <defaults>
</compile_context>

<pallas_src>
import jax
import jax.numpy as jnp
from jax import lax
from jax.experimental import pallas as pl
from jax.experimental.pallas import tpu as pltpu

EPS = 1e-5
_VMEM_LIMIT = 64 * 1024 * 1024


def _round_up(x, m):
    return (x + m - 1) // m * m


# ------------- pass 1: conv as (rows, K) x (K, Cp) matmul + BN partial stats -------------
def conv_stats_kernel(p_ref, w_ref, y_ref, s_ref, q_ref, acc_ref):
    k = pl.program_id(1)

    @pl.when(k == 0)
    def _():
        acc_ref[...] = jnp.zeros_like(acc_ref)

    acc_ref[...] += jnp.dot(p_ref[...], w_ref[...],
                            preferred_element_type=jnp.float32)

    @pl.when(k == pl.num_programs(1) - 1)
    def _():
        acc = acc_ref[...]
        y_ref[...] = acc.astype(y_ref.dtype)                 # bf16 intermediate
        s_ref[...] = jnp.sum(acc, axis=0, keepdims=True)     # (1, Cp) per-tile sum
        q_ref[...] = jnp.sum(acc * acc, axis=0, keepdims=True)  # (1, Cp) per-tile sum sq


# ------------- pass 2a: BN apply + ReLU + in-kernel transpose -> NCHW layout -------------
def bn_relu_t_kernel(y_ref, s_ref, t_ref, o_ref):
    cout = o_ref.shape[0]
    y = y_ref[...].astype(jnp.float32)                       # (ts, Cp)
    z = jnp.maximum(y * s_ref[...] + t_ref[...], 0.0)        # folded BN FMA + ReLU
    zt = jnp.transpose(z)                                    # (Cp, ts) on the XLU
    o_ref[...] = zt[:cout, :].astype(o_ref.dtype)            # lane-dense (Cout, ts) store


# ------------- pass 2b (fallback, odd spatial sizes): BN apply + ReLU, NHWC-flat -------------
def bn_relu_kernel(y_ref, s_ref, t_ref, o_ref):
    y = y_ref[...].astype(jnp.float32)
    o_ref[...] = jnp.maximum(y * s_ref[...] + t_ref[...], 0.0).astype(o_ref.dtype)


def conv33_relu(x_nchw, w_hwio, gamma, beta, *, tm=512):
    """x_nchw: (N,Cin,H,W) f32; w_hwio: (3,3,Cin,Cout); gamma/beta: (Cout,). -> (N,Cout,H,W) f32.

    tm: row-tile size (N*H*W rows per matmul). 512 fits v7x comfortably; on
    v5e/v6e (128 MiB VMEM) 1024+ can be profitable for large layers.
    """
    N, Cin, H, W = x_nchw.shape
    Cout = w_hwio.shape[-1]
    HW = H * W
    M = N * HW
    K = 9 * Cin
    Cp = _round_up(Cout, 128)            # lane-dense output channels

    # Row tiling; clamp so small inputs don't force padding copies.
    tm = max(8, min(tm, _round_up(M, 8)))
    n_tiles = pl.cdiv(M, tm)
    Mp = n_tiles * tm

    # Contraction tiling: stream K for deep layers (Cin multiple of 128) so big
    # row tiles still fit VMEM; otherwise single K step with the full (unpadded) K.
    if K > 1152 and K % 1152 == 0:
        tk = 1152
    else:
        tk = K
    n_k = K // tk

    # ---- glue (XLA): NCHW->NHWC (bf16), zero pad H/W by 1, im2col patches ----
    # TODO(synk): replace the 9x im2col materialization with halo-tiled row-band
    # DMA + in-kernel 3x3 accumulation to cut pass-1 HBM reads on v6e/v7x.
    x_nhwc = jnp.transpose(x_nchw, (0, 2, 3, 1)).astype(jnp.bfloat16)
    x_pad = jnp.pad(x_nhwc, ((0, 0), (1, 1), (1, 1), (0, 0)))
    cols = [x_pad[:, kh:kh + H, kw:kw + W, :] for kh in range(3) for kw in range(3)]
    patches = jnp.concatenate(cols, axis=-1).reshape(M, K)   # (M, 9*Cin), K unpadded
    if Mp != M:
        patches = jnp.pad(patches, ((0, Mp - M), (0, 0)))

    w_mat = w_hwio.reshape(K, Cout).astype(jnp.bfloat16)     # matches im2col K order
    if Cp != Cout:
        w_mat = jnp.pad(w_mat, ((0, 0), (0, Cp - Cout)))

    gamma_p = gamma.astype(jnp.float32)
    beta_p = beta.astype(jnp.float32)
    if Cp != Cout:
        gamma_p = jnp.pad(gamma_p, (0, Cp - Cout), constant_values=1.0)
        beta_p = jnp.pad(beta_p, (0, Cp - Cout))

    cost1 = pl.CostEstimate(
        flops=2 * Mp * K * Cp + 3 * Mp * Cp,
        transcendentals=0,
        bytes_accessed=Mp * K * 2 + n_tiles * K * Cp * 2 + Mp * Cp * 2
                       + 2 * n_tiles * Cp * 4)

    # ---- pass 1: K-blocked conv matmul + per-tile BN partial stats ----
    conv_out, s_part, q_part = pl.pallas_call(
        conv_stats_kernel,
        out_shape=(
            jax.ShapeDtypeStruct((Mp, Cp), jnp.bfloat16),
            jax.ShapeDtypeStruct((n_tiles, 1, Cp), jnp.float32),
            jax.ShapeDtypeStruct((n_tiles, 1, Cp), jnp.float32),
        ),
        grid=(n_tiles, n_k),
        in_specs=[
            pl.BlockSpec((tm, tk), lambda i, k: (i, k)),
            pl.BlockSpec((tk, Cp), lambda i, k: (k, 0)),
        ],
        out_specs=(
            pl.BlockSpec((tm, Cp), lambda i, k: (i, 0)),
            pl.BlockSpec((None, 1, Cp), lambda i, k: (i, 0, 0)),
            pl.BlockSpec((None, 1, Cp), lambda i, k: (i, 0, 0)),
        ),
        scratch_shapes=[pltpu.VMEM((tm, Cp), jnp.float32)],
        compiler_params=pltpu.CompilerParams(
            dimension_semantics=("parallel", "arbitrary"),
            vmem_limit_bytes=_VMEM_LIMIT),
        cost_estimate=cost1,
    )(patches, w_mat)

    # ---- tiny O(Cout) fold: batch mean / biased var -> per-channel FMA (scale, shift) ----
    # TODO(synk): one-pass E[x^2]-mean^2 in f32 can cancel for channels with
    # |mean| >> std; use a shifted/Welford-style combine if numerics-sensitive.
    total_s = jnp.sum(s_part[:, 0, :], axis=0)               # (Cp,), pad rows are zero
    total_q = jnp.sum(q_part[:, 0, :], axis=0)
    inv_cnt = jnp.float32(1.0) / jnp.float32(M)               # real element count
    mean = total_s * inv_cnt
    var = jnp.maximum(total_q * inv_cnt - mean * mean, 0.0)
    scale_v = gamma_p * lax.rsqrt(var + EPS)
    shift_v = beta_p - mean * scale_v
    scale = scale_v.reshape(1, Cp)
    shift = shift_v.reshape(1, Cp)

    cost2 = pl.CostEstimate(
        flops=3 * M * Cp, transcendentals=0,
        bytes_accessed=M * Cp * 2 + M * Cout * 4 + 2 * Cp * 4)

    # Spatial tile for the transposed epilogue: multiple of 128 dividing H*W.
    ts = None
    for cand in (512, 256, 128):
        if HW % cand == 0:
            ts = cand
            break
    if ts is None and HW % 8 == 0 and HW <= 4096:
        ts = HW

    if ts is not None:
        # ---- pass 2: fused BN + ReLU, in-kernel transpose, direct NCHW output ----
        n_sp = HW // ts
        out = pl.pallas_call(
            bn_relu_t_kernel,
            out_shape=jax.ShapeDtypeStruct((N, Cout, HW), jnp.float32),
            grid=(N, n_sp),
            in_specs=[
                pl.BlockSpec((ts, Cp), lambda n, j: (n * n_sp + j, 0)),
                pl.BlockSpec((1, Cp), lambda n, j: (0, 0)),
                pl.BlockSpec((1, Cp), lambda n, j: (0, 0)),
            ],
            out_specs=pl.BlockSpec((None, Cout, ts), lambda n, j: (n, 0, j)),
            compiler_params=pltpu.CompilerParams(
                dimension_semantics=("parallel", "parallel"),
                vmem_limit_bytes=_VMEM_LIMIT),
            cost_estimate=cost2,
        )(conv_out, scale, shift)
        return out.reshape(N, Cout, H, W)

    # ---- fallback (rare, odd spatial sizes): NHWC-flat epilogue + XLA transpose ----
    out_flat = pl.pallas_call(
        bn_relu_kernel,
        out_shape=jax.ShapeDtypeStruct((Mp, Cp), jnp.float32),
        grid=(n_tiles,),
        in_specs=[
            pl.BlockSpec((tm, Cp), lambda i: (i, 0)),
            pl.BlockSpec((1, Cp), lambda i: (0, 0)),
            pl.BlockSpec((1, Cp), lambda i: (0, 0)),
        ],
        out_specs=pl.BlockSpec((tm, Cp), lambda i: (i, 0)),
        compiler_params=pltpu.CompilerParams(
            dimension_semantics=("parallel",),
            vmem_limit_bytes=_VMEM_LIMIT),
        cost_estimate=cost2,
    )(conv_out, scale, shift)
    out_nhwc = out_flat[:M, :Cout].reshape(N, H, W, Cout)
    return jnp.transpose(out_nhwc, (0, 3, 1, 2))


if __name__ == "__main__":
    key = jax.random.PRNGKey(0)
    k_x, k_w = jax.random.split(key)

    N, Cin, Cout, H, W = 2, 4, 8, 16, 16

    x = jax.random.normal(k_x, (N, Cin, H, W), dtype=jnp.float32)
    w = jax.random.normal(k_w, (3, 3, Cin, Cout), dtype=jnp.float32) * 0.1  # HWIO
    gamma = jnp.ones((Cout,), jnp.float32)   # BatchNorm2d default init
    beta = jnp.zeros((Cout,), jnp.float32)

    out = conv33_relu(x, w, gamma, beta, tm=256)   # tm=256 -> 2 row tiles at this size
    jax.block_until_ready(out)
    assert out.shape == (N, Cout, H, W)

    # Pure-JAX reference. Kernel matmul operands and the conv intermediate are
    # bf16, so the reference conv is fed bf16-rounded inputs (f32 accumulation).
    x_r = x.astype(jnp.bfloat16).astype(jnp.float32)
    w_r = w.astype(jnp.bfloat16).astype(jnp.float32)
    ref_conv = lax.conv_general_dilated(
        x_r, w_r, window_strides=(1, 1), padding="SAME",
        dimension_numbers=("NCHW", "HWIO", "NCHW"))
    mu = ref_conv.mean(axis=(0, 2, 3), keepdims=True)
    va = ((ref_conv - mu) ** 2).mean(axis=(0, 2, 3), keepdims=True)
    ref = jnp.maximum((ref_conv - mu) * lax.rsqrt(va + EPS)
                      * gamma.reshape(1, -1, 1, 1) + beta.reshape(1, -1, 1, 1), 0.0)
    assert float(jnp.max(jnp.abs(out - ref))) < 5e-2

    print("KERNEL_OK")
</pallas_src>

<mosaic_0001>
module attributes {stable_mosaic.version = 11 : i64} {
  func.func @conv_stats_kernel(%arg0: i32, %arg1: i32, %arg2: memref<256x36xbf16, #tpu.memory_space<vmem>>, %arg3: memref<36x128xbf16, #tpu.memory_space<vmem>>, %arg4: memref<256x128xbf16, #tpu.memory_space<vmem>>, %arg5: memref<1x1x128xf32, #tpu.memory_space<vmem>>, %arg6: memref<1x1x128xf32, #tpu.memory_space<vmem>>, %arg7: memref<256x128xf32, #tpu.memory_space<vmem>>) attributes {dimension_semantics = [#tpu.dimension_semantics<parallel>, #tpu.dimension_semantics<arbitrary>], iteration_bounds = array<i64: 2, 1>, scalar_prefetch = 0 : i64, scratch_operands = 1 : i64, tpu.core_type = #tpu.core_type<tc>, window_params = [{transform_indices = @transform_0, window_bounds = array<i64: 256, 36>}, {transform_indices = @transform_1, window_bounds = array<i64: 36, 128>}, {transform_indices = @transform_2, window_bounds = array<i64: 256, 128>}, {transform_indices = @transform_3, window_bounds = array<i64: 1, 1, 128>}, {transform_indices = @transform_4, window_bounds = array<i64: 1, 1, 128>}]} {
    %c0_i32 = arith.constant 0 : i32
    %0 = arith.cmpi eq, %arg1, %c0_i32 : i32
    %1 = arith.extui %0 : i1 to i32
    %c0_i32_0 = arith.constant 0 : i32
    %2 = arith.cmpi ne, %1, %c0_i32_0 : i32
    scf.if %2 {
      %cst_10 = arith.constant 0.000000e+00 : f32
      %12 = vector.broadcast %cst_10 : f32 to vector<256x128xf32>
      %c0_11 = arith.constant 0 : index
      %c0_12 = arith.constant 0 : index
      %13 = vector.load %arg7[%c0_11, %c0_12] : memref<256x128xf32, #tpu.memory_space<vmem>>, vector<256x128xf32>
      tpu.vector_store %arg7[%c0_11, %c0_12], %12 {strides = array<i32>} : memref<256x128xf32, #tpu.memory_space<vmem>>, vector<256x128xf32>,
    } else {
    }
    %c0 = arith.constant 0 : index
    %c0_1 = arith.constant 0 : index
    %3 = vector.load %arg7[%c0, %c0_1] : memref<256x128xf32, #tpu.memory_space<vmem>>, vector<256x128xf32>
    %c0_2 = arith.constant 0 : index
    %c0_3 = arith.constant 0 : index
    %4 = vector.load %arg2[%c0_2, %c0_3] : memref<256x36xbf16, #tpu.memory_space<vmem>>, vector<256x36xbf16>
    %c0_4 = arith.constant 0 : index
    %c0_5 = arith.constant 0 : index
    %5 = vector.load %arg3[%c0_4, %c0_5] : memref<36x128xbf16, #tpu.memory_space<vmem>>, vector<36x128xbf16>
    %cst = arith.constant dense<0.000000e+00> : vector<256x128xf32>
    %6 = tpu.matmul %4, %5, %cst {dimension_numbers = #tpu.dot_dimension_numbers<[1], [0], [0], [1], [0, 0, 1, 1], [], []>} : vector<256x36xbf16>, vector<36x128xbf16>, vector<256x128xf32> -> vector<256x128xf32>
    %7 = arith.addf %3, %6 : vector<256x128xf32>
    %c0_6 = arith.constant 0 : index
    %c0_7 = arith.constant 0 : index
    %8 = vector.load %arg7[%c0_6, %c0_7] : memref<256x128xf32, #tpu.memory_space<vmem>>, vector<256x128xf32>
    tpu.vector_store %arg7[%c0_6, %c0_7], %7 {strides = array<i32>} : memref<256x128xf32, #tpu.memory_space<vmem>>, vector<256x128xf32>,
    %c0_i32_8 = arith.constant 0 : i32
    %9 = arith.cmpi eq, %arg1, %c0_i32_8 : i32
    %10 = arith.extui %9 : i1 to i32
    %c0_i32_9 = arith.constant 0 : i32
    %11 = arith.cmpi ne, %10, %c0_i32_9 : i32
    scf.if %11 {
      %c0_10 = arith.constant 0 : index
      %c0_11 = arith.constant 0 : index
      %12 = vector.load %arg7[%c0_10, %c0_11] : memref<256x128xf32, #tpu.memory_space<vmem>>, vector<256x128xf32>
      %13 = arith.truncf %12 : vector<256x128xf32> to vector<256x128xbf16>
      %c0_12 = arith.constant 0 : index
      %c0_13 = arith.constant 0 : index
      %14 = vector.load %arg4[%c0_12, %c0_13] : memref<256x128xbf16, #tpu.memory_space<vmem>>, vector<256x128xbf16>
      tpu.vector_store %arg4[%c0_12, %c0_13], %13 {strides = array<i32>} : memref<256x128xbf16, #tpu.memory_space<vmem>>, vector<256x128xbf16>,
      %cst_14 = arith.constant dense<0.000000e+00> : vector<128xf32>
      %15 = vector.multi_reduction <add>, %12, %cst_14 [0] : vector<256x128xf32> to vector<128xf32>
      %16 = vector.shape_cast %15 : vector<128xf32> to vector<1x128xf32>
      %c0_15 = arith.constant 0 : index
      %c0_16 = arith.constant 0 : index
      %c0_17 = arith.constant 0 : index
      %17 = vector.load %arg5[%c0_15, %c0_16, %c0_17] : memref<1x1x128xf32, #tpu.memory_space<vmem>>, vector<1x1x128xf32>
      %18 = vector.shape_cast %17 : vector<1x1x128xf32> to vector<1x128xf32>
      %19 = vector.shape_cast %16 : vector<1x128xf32> to vector<1x1x128xf32>
      tpu.vector_store %arg5[%c0_15, %c0_16, %c0_17], %19 {strides = array<i32>} : memref<1x1x128xf32, #tpu.memory_space<vmem>>, vector<1x1x128xf32>,
      %20 = arith.mulf %12, %12 : vector<256x128xf32>
      %cst_18 = arith.constant dense<0.000000e+00> : vector<128xf32>
      %21 = vector.multi_reduction <add>, %20, %cst_18 [0] : vector<256x128xf32> to vector<128xf32>
      %22 = vector.shape_cast %21 : vector<128xf32> to vector<1x128xf32>
      %c0_19 = arith.constant 0 : index
      %c0_20 = arith.constant 0 : index
      %c0_21 = arith.constant 0 : index
      %23 = vector.load %arg6[%c0_19, %c0_20, %c0_21] : memref<1x1x128xf32, #tpu.memory_space<vmem>>, vector<1x1x128xf32>
      %24 = vector.shape_cast %23 : vector<1x1x128xf32> to vector<1x128xf32>
      %25 = vector.shape_cast %22 : vector<1x128xf32> to vector<1x1x128xf32>
      tpu.vector_store %arg6[%c0_19, %c0_20, %c0_21], %25 {strides = array<i32>} : memref<1x1x128xf32, #tpu.memory_space<vmem>>, vector<1x1x128xf32>,
    } else {
    }
    return
  }
  func.func @transform_0(%arg0: i32, %arg1: i32) -> (i32, i32) {
    %c0_i32 = arith.constant 0 : i32
    return %arg0, %arg1 : i32, i32
  }
  func.func @transform_1(%arg0: i32, %arg1: i32) -> (i32, i32) {
    %c0_i32 = arith.constant 0 : i32
    %c0_i32_0 = arith.constant 0 : i32
    return %arg1, %c0_i32 : i32, i32
  }
  func.func @transform_2(%arg0: i32, %arg1: i32) -> (i32, i32) {
    %c0_i32 = arith.constant 0 : i32
    %c0_i32_0 = arith.constant 0 : i32
    return %arg0, %c0_i32 : i32, i32
  }
  func.func @transform_3(%arg0: i32, %arg1: i32) -> (i32, i32, i32) {
    %c0_i32 = arith.constant 0 : i32
    %c0_i32_0 = arith.constant 0 : i32
    %c0_i32_1 = arith.constant 0 : i32
    return %arg0, %c0_i32, %c0_i32_0 : i32, i32, i32
  }
  func.func @transform_4(%arg0: i32, %arg1: i32) -> (i32, i32, i32) {
    %c0_i32 = arith.constant 0 : i32
    %c0_i32_0 = arith.constant 0 : i32
    %c0_i32_1 = arith.constant 0 : i32
    return %arg0, %c0_i32, %c0_i32_0 : i32, i32, i32
  }
}

</mosaic_0001>

<llo_original>
// kernel: tpu_custom_call.1
$region0: #{tpu_custom_call.1}
  #allocation0 [shape = 'u32[]', space=smem, size = 0x4, offset = 0x4, fixed_abs, tag = 'smem constant byte address 0x4 - core index']
  #allocation1 [shape = 'u32[144,128]{1,0:T(1,128)}', space=vmem, size = 0x12000, scoped, tag = 'internal scratch']
  #allocation2 [shape = 'f32[256,128]{1,0:T(8,128)}', space=vmem, size = 0x20000, scoped, tag = 'scratch operand']
  %s0 = inlined_call_operand.hbm [shape: bf16[512,36], index: 0, kind: input, shape index: {}]
  %s1 = inlined_call_operand.hbm [shape: bf16[36,128], index: 1, kind: input, shape index: {}]
  %s2 = inlined_call_operand.hbm [shape: bf16[512,128], index: 2, kind: output, shape index: {0}]
  %s3 = inlined_call_operand.hbm [shape: f32[2,1,128], index: 3, kind: output, shape index: {1}]
  %s4 = inlined_call_operand.hbm [shape: f32[2,1,128], index: 4, kind: output, shape index: {2}]
  %5 = xla_tuple %s2, %s3, %s4
  %s6 = sld [smem:[#allocation0]]
  $region73: #{tpu_custom_call.1} parent=0
    _
  %s8 = ssub.s32 1, %s6
  %s9 = scalar_select 0, %s8, %s6
  $region1: #{tpu_custom_call.1} parent=0
    #allocation3 [shape = 'u8[131072]{0}', space=vmem, size = 0x20000, scoped, tag = 'input window, operand 0']
    #allocation4 [shape = 's32[2]{0}', space=sflag, size = 0x8, scoped, tag = 'scoped memory for tpu_custom_call.1']
    #allocation5 [shape = 's32[2]{0}', space=sflag, size = 0x8, scoped, tag = 'scoped memory for tpu_custom_call.1']
    #allocation6 [shape = 'u8[10240]{0}', space=vmem, size = 0x2800, scoped, tag = 'input window, operand 1, single buffered']
    #allocation7 [shape = 's32[1]{0}', space=sflag, size = 0x4, scoped, tag = 'scoped memory for tpu_custom_call.1']
    #allocation8 [shape = 'u8[131072]{0}', space=vmem, size = 0x20000, scoped, tag = 'output window, operand 0']
    #allocation9 [shape = 'u8[1024]{0}', space=vmem, size = 0x400, scoped, tag = 'output window, operand 1']
    #allocation10 [shape = 's32[2]{0}', space=sflag, size = 0x8, scoped, tag = 'scoped memory for tpu_custom_call.1']
    #allocation11 [shape = 'u8[1024]{0}', space=vmem, size = 0x400, scoped, tag = 'output window, operand 2']
    %10 = vsyncpa [#allocation4], 0
    %s11 = scalar_lea.sflag [#allocation4], 1
    %12 = vsyncpa %s11, 0
    %13 = vsyncpa [#allocation7], 0
    %14 = vsyncpa [#allocation5], 0
    %s15 = scalar_lea.sflag [#allocation5], 1
    %16 = vsyncpa %s15, 0
    %17 = vsyncpa [#allocation10], 0
    %s18 = scalar_lea.sflag [#allocation10], 1
    %19 = vsyncpa %s18, 0
    loop: start=0, step=1, limit=4
    $region2: #{tpu_custom_call.1} parent=1 // loop_pre_header
      _
    $region3: #{tpu_custom_call.1} parent=1 // loop_header
      %s21 = sphi 0, %s25
      %p22 = scmp.ge.s32.totalorder %s21, 4
      %s28 = sphi 0, %s40
      %s29 = sphi 0, %s36
      %s30 = sphi 0, %s28
      %s31 = sphi 0, %s29
      %s32 = sphi 0, %s30
      %s33 = sphi 0, %s31
      %s45 = sphi 0, %s47
      %s48 = sphi 0, %s45
      %s49 = sphi 0, %s48
      %s65 = sphi 0, %s49
      %s71 = sphi 0, %s73
      %s74 = sphi 0, %s71
      %s75 = sphi 0, %s74
      %s91 = sphi 0, %s75
      %s97 = sphi 0, %s99
      %s100 = sphi 0, %s97
      %s101 = sphi 0, %s100
      %s117 = sphi 0, %s101
      %s123 = sphi 0, %s125
      %s126 = sphi 0, %s123
      %s127 = sphi 0, %s126
      %s143 = sphi 0, %s127
      %s149 = sphi 0, %s151
      %s152 = sphi 0, %s149
      %s153 = sphi 0, %s152
      %s169 = sphi 0, %s153
    $region4: #{tpu_custom_call.1} parent=1 // loop_header_branch
      %24 = sbr.rel (%p22) target = $region8
    $region5: #{tpu_custom_call.1} parent=1 // loop_body
      %s26 = ssub.s32 %s21, 1
      %s27 = ssub.s32 %s21, 2
      %s34 = sadd.s32 1, %s29
      %p35 = scmp.ge.s32.totalorder %s34, 1
      %s36 = scalar_select %p35, 0, %s34
      %s37 = sadd.s32 1, %s28
      %s38 = scalar_select %p35, %s37, %s28
      %p39 = scmp.ge.s32.totalorder %s38, 2
      %s40 = scalar_select %p39, 0, %s38
      %s41 = ssub.s32 %s28, %s40
      %s42 = ssub.s32 %s29, %s36
      %s43 = sor.u32 %s41, %s42
      %p44 = scmp.eq.s32.totalorder %s43, 0
      %s46 = sadd.s32 %s45, 1
      %s47 = scalar_select %p44, %s45, %s46
      %p50 = pneg %p44
      %p51 = scmp.eq.s32.totalorder %s21, 1
      %p52 = por %p50, %p51
      %p53 = scmp.ne.s32.totalorder %s45, %s48
      %p54 = scmp.eq.s32.totalorder %s21, 0
      %p55 = por %p53, %p54
      %p56 = scmp.ne.s32.totalorder %s45, %s48
      %p57 = scmp.eq.s32.totalorder %s26, 1
      %p58 = por %p56, %p57
      %p59 = scmp.ne.s32.totalorder %s48, %s49
      %p60 = scmp.eq.s32.totalorder %s26, 0
      %p61 = por %p59, %p60
      %p62 = scmp.ne.s32.totalorder %s48, %s49
      %p63 = scmp.eq.s32.totalorder %s27, 1
      %p64 = por %p62, %p63
      %p66 = scmp.ne.s32.totalorder %s49, %s65
      %p67 = scmp.eq.s32.totalorder %s27, 0
      %p68 = por %p66, %p67
      %s69 = ssub.s32 %s29, %s36
      %p70 = scmp.eq.s32.totalorder %s69, 0
      %s72 = sadd.s32 %s71, 1
      %s73 = scalar_select %p70, %s71, %s72
      %p76 = pneg %p70
      %p77 = scmp.eq.s32.totalorder %s21, 1
      %p78 = por %p76, %p77
      %p79 = scmp.ne.s32.totalorder %s71, %s74
      %p80 = scmp.eq.s32.totalorder %s21, 0
      %p81 = por %p79, %p80
      %p82 = scmp.ne.s32.totalorder %s71, %s74
      %p83 = scmp.eq.s32.totalorder %s26, 1
      %p84 = por %p82, %p83
      %p85 = scmp.ne.s32.totalorder %s74, %s75
      %p86 = scmp.eq.s32.totalorder %s26, 0
      %p87 = por %p85, %p86
      %p88 = scmp.ne.s32.totalorder %s74, %s75
      %p89 = scmp.eq.s32.totalorder %s27, 1
      %p90 = por %p88, %p89
      %p92 = scmp.ne.s32.totalorder %s75, %s91
      %p93 = scmp.eq.s32.totalorder %s27, 0
      %p94 = por %p92, %p93
      %s95 = ssub.s32 %s28, %s40
      %p96 = scmp.eq.s32.totalorder %s95, 0
      %s98 = sadd.s32 %s97, 1
      %s99 = scalar_select %p96, %s97, %s98
      %p102 = pneg %p96
      %p103 = scmp.eq.s32.totalorder %s21, 1
      %p104 = por %p102, %p103
      %p105 = scmp.ne.s32.totalorder %s97, %s100
      %p106 = scmp.eq.s32.totalorder %s21, 0
      %p107 = por %p105, %p106
      %p108 = scmp.ne.s32.totalorder %s97, %s100
      %p109 = scmp.eq.s32.totalorder %s26, 1
      %p110 = por %p108, %p109
      %p111 = scmp.ne.s32.totalorder %s100, %s101
      %p112 = scmp.eq.s32.totalorder %s26, 0
      %p113 = por %p111, %p112
      %p114 = scmp.ne.s32.totalorder %s100, %s101
      %p115 = scmp.eq.s32.totalorder %s27, 1
      %p116 = por %p114, %p115
      %p118 = scmp.ne.s32.totalorder %s101, %s117
      %p119 = scmp.eq.s32.totalorder %s27, 0
      %p120 = por %p118, %p119
      %s121 = ssub.s32 %s28, %s40
      %p122 = scmp.eq.s32.totalorder %s121, 0
      %s124 = sadd.s32 %s123, 1
      %s125 = scalar_select %p122, %s123, %s124
      %p128 = pneg %p122
      %p129 = scmp.eq.s32.totalorder %s21, 1
      %p130 = por %p128, %p129
      %p131 = scmp.ne.s32.totalorder %s123, %s126
      %p132 = scmp.eq.s32.totalorder %s21, 0
      %p133 = por %p131, %p132
      %p134 = scmp.ne.s32.totalorder %s123, %s126
      %p135 = scmp.eq.s32.totalorder %s26, 1
      %p136 = por %p134, %p135
      %p137 = scmp.ne.s32.totalorder %s126, %s127
      %p138 = scmp.eq.s32.totalorder %s26, 0
      %p139 = por %p137, %p138
      %p140 = scmp.ne.s32.totalorder %s126, %s127
      %p141 = scmp.eq.s32.totalorder %s27, 1
      %p142 = por %p140, %p141
      %p144 = scmp.ne.s32.totalorder %s127, %s143
      %p145 = scmp.eq.s32.totalorder %s27, 0
      %p146 = por %p144, %p145
      %s147 = ssub.s32 %s28, %s40
      %p148 = scmp.eq.s32.totalorder %s147, 0
      %s150 = sadd.s32 %s149, 1
      %s151 = scalar_select %p148, %s149, %s150
      %p154 = pneg %p148
      %p155 = scmp.eq.s32.totalorder %s21, 1
      %p156 = por %p154, %p155
      %p157 = scmp.ne.s32.totalorder %s149, %s152
      %p158 = scmp.eq.s32.totalorder %s21, 0
      %p159 = por %p157, %p158
      %p160 = scmp.ne.s32.totalorder %s149, %s152
      %p161 = scmp.eq.s32.totalorder %s26, 1
      %p162 = por %p160, %p161
      %p163 = scmp.ne.s32.totalorder %s152, %s153
      %p164 = scmp.eq.s32.totalorder %s26, 0
      %p165 = por %p163, %p164
      %p166 = scmp.ne.s32.totalorder %s152, %s153
      %p167 = scmp.eq.s32.totalorder %s27, 1
      %p168 = por %p166, %p167
      %p170 = scmp.ne.s32.totalorder %s153, %s169
      %p171 = scmp.eq.s32.totalorder %s27, 0
      %p172 = por %p170, %p171
      %p173 = scmp.le.s32.totalorder 1, %s21
      %p174 = scmp.lt.s32.totalorder %s21, 3
      %p175 = pnand %p173, %p174
      %p176 = pneg %p175
      // Predicated region
      $region9: #{tpu_custom_call.1} parent=5 // pred_check
        _
      $region10: #{tpu_custom_call.1} parent=5 // pred_check_branch
        %178 = sbr.rel (%p175) target = $region12
      $region11: #{tpu_custom_call.1} parent=5 // pred_region
        %s179 = ssub.s32 %s21, 1
        // Predicated region
        $region13: #{tpu_custom_call.1} parent=11 // pred_check
          %p180 = pneg %p87
        $region14: #{tpu_custom_call.1} parent=11 // pred_check_branch
          %182 = sbr.rel (%p180) target = $region16
        $region15: #{tpu_custom_call.1} parent=11 // pred_region
          %s183 = smul.u32 5, %s31
          %s185 = ssub.s32 320, 320
          %186 = vsyncadd [#allocation7], %s185
          %s187 = smul.addr %s183, 64
          %s188 = scalar_lea.hbm %s1, %s187
          %s189 = sshll.u32 [#allocation6], 4
          %s190 = int_to_ptr.vmem [resolvable:$true] %s189
          %195 = dma.hbm_to_vmem [thread:$0]  %s188, 320, %s190, [#allocation7], 64, 64, 4
        $region16: #{tpu_custom_call.1} parent=11 // pred_fallthru
          _
      $region12: #{tpu_custom_call.1} parent=5 // pred_fallthru
        _
      %p196 = scmp.lt.s32.totalorder %s21, 2
      // Predicated region
      $region17: #{tpu_custom_call.1} parent=5 // pred_check
        %p197 = pneg %p196
      $region18: #{tpu_custom_call.1} parent=5 // pred_check_branch
        %199 = sbr.rel (%p197) target = $region20
      $region19: #{tpu_custom_call.1} parent=5 // pred_region
        // Predicated region
        $region21: #{tpu_custom_call.1} parent=19 // pred_check
          %p200 = pneg %p55
        $region22: #{tpu_custom_call.1} parent=19 // pred_check_branch
          %202 = sbr.rel (%p200) target = $region24
        $region23: #{tpu_custom_call.1} parent=19 // pred_region
          %s203 = sand.u32 %s45, 1
          %s204 = scalar_lea.sflag [#allocation4], %s203
          %s205 = sand.u32 %s45, 1
          %s206 = smul.addr %s205, 128
          %s207 = scalar_lea.vmem [#allocation3], %s206
          %s208 = smul.u32 32, %s28
          %s210 = ssub.s32 2048, 2048
          %211 = vsyncadd %s204, %s210
          %s212 = sadd.s32 %s29, %s208
          %s213 = smul.addr %s212, 64
          %s214 = scalar_lea.hbm %s0, %s213
          %s215 = sshll.u32 %s207, 4
          %s216 = int_to_ptr.vmem [resolvable:$true] %s215
          %221 = dma.hbm_to_vmem [thread:$0]  %s214, 2048, %s216, %s204, 64, 64, 4
        $region24: #{tpu_custom_call.1} parent=19 // pred_fallthru
          _
      $region20: #{tpu_custom_call.1} parent=5 // pred_fallthru
        _
      %p222 = scmp.le.s32.totalorder 1, %s21
      %p223 = scmp.lt.s32.totalorder %s21, 3
      %p224 = pnand %p222, %p223
      %p225 = pneg %p224
      // Predicated region
      $region25: #{tpu_custom_call.1} parent=5 // pred_check
        _
      $region26: #{tpu_custom_call.1} parent=5 // pred_check_branch
        %227 = sbr.rel (%p224) target = $region28
      $region27: #{tpu_custom_call.1} parent=5 // pred_region
        %s228 = ssub.s32 %s21, 1
        %s229 = sand.u32 %s48, 1
        %s230 = scalar_lea.sflag [#allocation4], %s229
        %s231 = sand.u32 %s48, 1
        %s232 = smul.addr %s231, 128
        %s233 = scalar_lea.vmem [#allocation3], %s232
        // Predicated region
        $region29: #{tpu_custom_call.1} parent=27 // pred_check
          %p234 = pneg %p61
        $region30: #{tpu_custom_call.1} parent=27 // pred_check_branch
          %236 = sbr.rel (%p234) target = $region32
        $region31: #{tpu_custom_call.1} parent=27 // pred_region
          %237 = dma.done %s230, 2048
        $region32: #{tpu_custom_call.1} parent=27 // pred_fallthru
          _
        // Predicated region
        $region33: #{tpu_custom_call.1} parent=27 // pred_check
          %p238 = pneg %p87
        $region34: #{tpu_custom_call.1} parent=27 // pred_check_branch
          %240 = sbr.rel (%p238) target = $region36
        $region35: #{tpu_custom_call.1} parent=27 // pred_region
          %241 = dma.done [#allocation7], 320
        $region36: #{tpu_custom_call.1} parent=27 // pred_fallthru
          _
        %s242 = sand.u32 %s48, 1
        %s243 = scalar_lea.sflag [#allocation4], %s242
        %s244 = sand.u32 %s48, 1
        %s245 = smul.addr %s244, 128
        %s246 = scalar_lea.vmem [#allocation3], %s245
        %p247 = pneg %p61
        %p248 = pneg %p58
        %p249 = pneg %p87
        %p250 = pneg %p84
        %p251 = pneg %p113
        %p252 = pneg %p110
        %s253 = sand.u32 %s100, 1
        %s254 = scalar_lea.sflag [#allocation5], %s253
        %s255 = sand.u32 %s100, 1
        %s256 = smul.addr %s255, 128
        %s257 = scalar_lea.vmem [#allocation8], %s256
        %p258 = pneg %p139
        %p259 = pneg %p136
        %s260 = sand.u32 %s26, 1
        %s261 = scalar_lea.sflag [#allocation10], %s260
        %s262 = sand.u32 %s126, 1
        %s263 = scalar_lea.vmem [#allocation9], %s262
        %p264 = pneg %p165
        %p265 = pneg %p162
        %s266 = sand.u32 %s26, 1
        %s267 = scalar_lea.sflag [#allocation10], %s266
        %s268 = sand.u32 %s152, 1
        %s269 = scalar_lea.vmem [#allocation11], %s268
        %s270 = smul.u32 32, %s30
        %s271 = smul.u32 5, %s31
        %s272 = smul.u32 32, %s30
        %p274 = scmp.eq.s32.totalorder %s31, 0
        // Predicated region
        $region37: #{tpu_custom_call.1} parent=27 // pred_check
          %p275 = pneg %p274
        $region38: #{tpu_custom_call.1} parent=27 // pred_check_branch
          %277 = sbr.rel (%p275) target = $region40
        $region39: #{tpu_custom_call.1} parent=27 // pred_region
          %278 = vst [vmem:[#allocation2] sm:$0xff] 0.0
          %279 = vst [vmem:[#allocation2 + $0x8] sm:$0xff] 0.0
          %280 = vst [vmem:[#allocation2 + $0x10] sm:$0xff] 0.0
          %281 = vst [vmem:[#allocation2 + $0x18] sm:$0xff] 0.0
          %282 = vst [vmem:[#allocation2 + $0x20] sm:$0xff] 0.0
          %283 = vst [vmem:[#allocation2 + $0x28] sm:$0xff] 0.0
          %284 = vst [vmem:[#allocation2 + $0x30] sm:$0xff] 0.0
          %285 = vst [vmem:[#allocation2 + $0x38] sm:$0xff] 0.0
          %286 = vst [vmem:[#allocation2 + $0x40] sm:$0xff] 0.0
          %287 = vst [vmem:[#allocation2 + $0x48] sm:$0xff] 0.0
          %288 = vst [vmem:[#allocation2 + $0x50] sm:$0xff] 0.0
          %289 = vst [vmem:[#allocation2 + $0x58] sm:$0xff] 0.0
          %290 = vst [vmem:[#allocation2 + $0x60] sm:$0xff] 0.0
          %291 = vst [vmem:[#allocation2 + $0x68] sm:$0xff] 0.0
          %292 = vst [vmem:[#allocation2 + $0x70] sm:$0xff] 0.0
          %293 = vst [vmem:[#allocation2 + $0x78] sm:$0xff] 0.0
          %294 = vst [vmem:[#allocation2 + $0x80] sm:$0xff] 0.0
          %295 = vst [vmem:[#allocation2 + $0x88] sm:$0xff] 0.0
          %296 = vst [vmem:[#allocation2 + $0x90] sm:$0xff] 0.0
          %297 = vst [vmem:[#allocation2 + $0x98] sm:$0xff] 0.0
          %298 = vst [vmem:[#allocation2 + $0xa0] sm:$0xff] 0.0
          %299 = vst [vmem:[#allocation2 + $0xa8] sm:$0xff] 0.0
          %300 = vst [vmem:[#allocation2 + $0xb0] sm:$0xff] 0.0
          %301 = vst [vmem:[#allocation2 + $0xb8] sm:$0xff] 0.0
          %302 = vst [vmem:[#allocation2 + $0xc0] sm:$0xff] 0.0
          %303 = vst [vmem:[#allocation2 + $0xc8] sm:$0xff] 0.0
          %304 = vst [vmem:[#allocation2 + $0xd0] sm:$0xff] 0.0
          %305 = vst [vmem:[#allocation2 + $0xd8] sm:$0xff] 0.0
          %306 = vst [vmem:[#allocation2 + $0xe0] sm:$0xff] 0.0
          %307 = vst [vmem:[#allocation2 + $0xe8] sm:$0xff] 0.0
          %308 = vst [vmem:[#allocation2 + $0xf0] sm:$0xff] 0.0
          %309 = vst [vmem:[#allocation2 + $0xf8] sm:$0xff] 0.0
        $region40: #{tpu_custom_call.1} parent=27 // pred_fallthru
          _
        %v310 = vld [vmem:[#allocation2] sm:$0xff]
        %v311 = vld [vmem:[#allocation2 + $0x8] sm:$0xff]
        %v312 = vld [vmem:[#allocation2 + $0x10] sm:$0xff]
        %v313 = vld [vmem:[#allocation2 + $0x18] sm:$0xff]
        %v314 = vld [vmem:[#allocation2 + $0x20] sm:$0xff]
        %v315 = vld [vmem:[#allocation2 + $0x28] sm:$0xff]
        %v316 = vld [vmem:[#allocation2 + $0x30] sm:$0xff]
        %v317 = vld [vmem:[#allocation2 + $0x38] sm:$0xff]
        %v318 = vld [vmem:[#allocation2 + $0x40] sm:$0xff]
        %v319 = vld [vmem:[#allocation2 + $0x48] sm:$0xff]
        %v320 = vld [vmem:[#allocation2 + $0x50] sm:$0xff]
        %v321 = vld [vmem:[#allocation2 + $0x58] sm:$0xff]
        %v322 = vld [vmem:[#allocation2 + $0x60] sm:$0xff]
        %v323 = vld [vmem:[#allocation2 + $0x68] sm:$0xff]
        %v324 = vld [vmem:[#allocation2 + $0x70] sm:$0xff]
        %v325 = vld [vmem:[#allocation2 + $0x78] sm:$0xff]
        %v326 = vld [vmem:[#allocation2 + $0x80] sm:$0xff]
        %v327 = vld [vmem:[#allocation2 + $0x88] sm:$0xff]
        %v328 = vld [vmem:[#allocation2 + $0x90] sm:$0xff]
        %v329 = vld [vmem:[#allocation2 + $0x98] sm:$0xff]
        %v330 = vld [vmem:[#allocation2 + $0xa0] sm:$0xff]
        %v331 = vld [vmem:[#allocation2 + $0xa8] sm:$0xff]
        %v332 = vld [vmem:[#allocation2 + $0xb0] sm:$0xff]
        %v333 = vld [vmem:[#allocation2 + $0xb8] sm:$0xff]
        %v334 = vld [vmem:[#allocation2 + $0xc0] sm:$0xff]
        %v335 = vld [vmem:[#allocation2 + $0xc8] sm:$0xff]
        %v336 = vld [vmem:[#allocation2 + $0xd0] sm:$0xff]
        %v337 = vld [vmem:[#allocation2 + $0xd8] sm:$0xff]
        %v338 = vld [vmem:[#allocation2 + $0xe0] sm:$0xff]
        %v339 = vld [vmem:[#allocation2 + $0xe8] sm:$0xff]
        %v340 = vld [vmem:[#allocation2 + $0xf0] sm:$0xff]
        %v341 = vld [vmem:[#allocation2 + $0xf8] sm:$0xff]
        %v342 = vld [vmem:[%s233] sm:$0xf]
        %v343 = vld [vmem:[%s233 + $0x4] sm:$0xf]
        %v344 = vld [vmem:[%s233 + $0x8] sm:$0xf]
        %v345 = vld [vmem:[%s233 + $0xc] sm:$0xf]
        %v346 = vld [vmem:[%s233 + $0x10] sm:$0xf]
        %v347 = vld [vmem:[%s233 + $0x14] sm:$0xf]
        %v348 = vld [vmem:[%s233 + $0x18] sm:$0xf]
        %v349 = vld [vmem:[%s233 + $0x1c] sm:$0xf]
        %v350 = vld [vmem:[%s233 + $0x20] sm:$0xf]
        %v351 = vld [vmem:[%s233 + $0x24] sm:$0xf]
        %v352 = vld [vmem:[%s233 + $0x28] sm:$0xf]
        %v353 = vld [vmem:[%s233 + $0x2c] sm:$0xf]
        %v354 = vld [vmem:[%s233 + $0x30] sm:$0xf]
        %v355 = vld [vmem:[%s233 + $0x34] sm:$0xf]
        %v356 = vld [vmem:[%s233 + $0x38] sm:$0xf]
        %v357 = vld [vmem:[%s233 + $0x3c] sm:$0xf]
        %v358 = vld [vmem:[%s233 + $0x40] sm:$0xf]
        %v359 = vld [vmem:[%s233 + $0x44] sm:$0xf]
        %v360 = vld [vmem:[%s233 + $0x48] sm:$0xf]
        %v361 = vld [vmem:[%s233 + $0x4c] sm:$0xf]
        %v362 = vld [vmem:[%s233 + $0x50] sm:$0xf]
        %v363 = vld [vmem:[%s233 + $0x54] sm:$0xf]
        %v364 = vld [vmem:[%s233 + $0x58] sm:$0xf]
        %v365 = vld [vmem:[%s233 + $0x5c] sm:$0xf]
        %v366 = vld [vmem:[%s233 + $0x60] sm:$0xf]
        %v367 = vld [vmem:[%s233 + $0x64] sm:$0xf]
        %v368 = vld [vmem:[%s233 + $0x68] sm:$0xf]
        %v369 = vld [vmem:[%s233 + $0x6c] sm:$0xf]
        %v370 = vld [vmem:[%s233 + $0x70] sm:$0xf]
        %v371 = vld [vmem:[%s233 + $0x74] sm:$0xf]
        %v372 = vld [vmem:[%s233 + $0x78] sm:$0xf]
        %v373 = vld [vmem:[%s233 + $0x7c] sm:$0xf]
        %v374 = vld [vmem:[#allocation6] sm:$0xf]
        %v375 = vld [vmem:[#allocation6 + $0x4] sm:$0xf]
        %v376 = vld [vmem:[#allocation6 + $0x8] sm:$0xf]
        %v377 = vld [vmem:[#allocation6 + $0xc] sm:$0xf]
        %v378 = vld [vmem:[#allocation6 + $0x10] sm:$0x3]
        %v411 = vunpack.c.l.b16 %v342
        %v412 = vunpack.c.l.b16 %v343
        %v413 = vunpack.c.l.b16 %v344
        %v414 = vunpack.c.l.b16 %v345
        %v415 = vunpack.c.l.b16 %v346
        %v416 = vunpack.c.l.b16 %v347
        %v417 = vunpack.c.l.b16 %v348
        %v418 = vunpack.c.l.b16 %v349
        %v419 = vunpack.c.l.b16 %v350
        %v420 = vunpack.c.l.b16 %v351
        %v421 = vunpack.c.l.b16 %v352
        %v422 = vunpack.c.l.b16 %v353
        %v423 = vunpack.c.l.b16 %v354
        %v424 = vunpack.c.l.b16 %v355
        %v425 = vunpack.c.l.b16 %v356
        %v426 = vunpack.c.l.b16 %v357
        %v427 = vunpack.c.l.b16 %v358
        %v428 = vunpack.c.l.b16 %v359
        %v429 = vunpack.c.l.b16 %v360
        %v430 = vunpack.c.l.b16 %v361
        %v431 = vunpack.c.l.b16 %v362
        %v432 = vunpack.c.l.b16 %v363
        %v433 = vunpack.c.l.b16 %v364
        %v434 = vunpack.c.l.b16 %v365
        %v435 = vunpack.c.l.b16 %v366
        %v436 = vunpack.c.l.b16 %v367
        %v437 = vunpack.c.l.b16 %v368
        %v438 = vunpack.c.l.b16 %v369
        %v439 = vunpack.c.l.b16 %v370
        %v440 = vunpack.c.l.b16 %v371
        %v441 = vunpack.c.l.b16 %v372
        %v442 = vunpack.c.l.b16 %v373
        %v443 = vpack.c.b16 %v412, %v411
        %v444 = vpack.c.b16 %v414, %v413
        %v445 = vpack.c.b16 %v416, %v415
        %v446 = vpack.c.b16 %v418, %v417
        %v447 = vpack.c.b16 %v420, %v419
        %v448 = vpack.c.b16 %v422, %v421
        %v449 = vpack.c.b16 %v424, %v423
        %v450 = vpack.c.b16 %v426, %v425
        %v451 = vpack.c.b16 %v428, %v427
        %v452 = vpack.c.b16 %v430, %v429
        %v453 = vpack.c.b16 %v432, %v431
        %v454 = vpack.c.b16 %v434, %v433
        %v455 = vpack.c.b16 %v436, %v435
        %v456 = vpack.c.b16 %v438, %v437
        %v457 = vpack.c.b16 %v440, %v439
        %v458 = vpack.c.b16 %v442, %v441
        %v464 = vunpack.c.l.b16 %v374
        %v465 = vunpack.c.l.b16 %v375
        %v466 = vunpack.c.l.b16 %v376
        %v467 = vunpack.c.l.b16 %v377
        %v468 = vunpack.c.l.b16 %v378
        %v469 = vpack.c.b16 %v465, %v464
        %v470 = vpack.c.b16 %v467, %v466
        %v471 = vpack.c.b16 %v468, %v468
        %vm474 = vcmask 293888
        %v476 = vsel %vm474, %v443, 0
        %v479 = vsel %vm474, %v444, 0
        %v482 = vsel %vm474, %v445, 0
        %v485 = vsel %vm474, %v446, 0
        %v488 = vsel %vm474, %v447, 0
        %v491 = vsel %vm474, %v448, 0
        %v494 = vsel %vm474, %v449, 0
        %v497 = vsel %vm474, %v450, 0
        %v500 = vsel %vm474, %v451, 0
        %v503 = vsel %vm474, %v452, 0
        %v506 = vsel %vm474, %v453, 0
        %v509 = vsel %vm474, %v454, 0
        %v512 = vsel %vm474, %v455, 0
        %v515 = vsel %vm474, %v456, 0
        %v518 = vsel %vm474, %v457, 0
        %v521 = vsel %vm474, %v458, 0
        %vm523 = vcmask 1041408
        %v525 = vsel %vm523, %v471, 0
        %527 = vmatprep.subr.bf16.mxu0 0
        %528 = vmatpush1.bf16.msra.mxu0 %v469
        %529 = vmatprep.subr.bf16.mxu0 0
        %530 = vmatpush1.bf16.msra.mxu0 %v470
        %531 = vmatprep.subr.bf16.mxu0 0
        %532 = vmatpush1.bf16.msra.mxu0 %v525
        %533 = vmatprep.subr.bf16.mxu0 0
        %534 = vmatpush1.bf16.msra.mxu0 0
        %535 = vmatprep.subr.bf16.mxu0 0
        %536 = vmatpush1.bf16.msra.mxu0 0
        %537 = vmatprep.subr.bf16.mxu0 0
        %538 = vmatpush1.bf16.msra.mxu0 0
        %539 = vmatprep.subr.bf16.mxu0 0
        %540 = vmatpush1.bf16.msra.mxu0 0
        %541 = vmatprep.subr.bf16.mxu0 0
        %542 = vmatpush1.bf16.msra.mxu0 0
        %543 = vmatprep.subr.bf16.mxu0 0
        %544 = vmatpush1.bf16.msra.mxu0 0
        %545 = vmatprep.subr.bf16.mxu0 0
        %546 = vmatpush1.bf16.msra.mxu0 0
        %547 = vmatprep.subr.bf16.mxu0 0
        %548 = vmatpush1.bf16.msra.mxu0 0
        %549 = vmatprep.subr.bf16.mxu0 0
        %550 = vmatpush1.bf16.msra.mxu0 0
        %551 = vmatprep.subr.bf16.mxu0 0
        %552 = vmatpush1.bf16.msra.mxu0 0
        %553 = vmatprep.subr.bf16.mxu0 0
        %554 = vmatpush1.bf16.msra.mxu0 0
        %555 = vmatprep.subr.bf16.mxu0 0
        %556 = vmatpush1.bf16.msra.mxu0 0
        %557 = vmatprep.subr.bf16.mxu0 0
        %558 = vmatpush1.bf16.msra.mxu0 0
        %559 = vmatprep.mubr.bf16.mxu0 0
        %560 = vmatmul.mubr.bf16.gmra.mrb[0].mxu0 %v476
        %v561 = vpop.f32.mrb[0].mxu0
        %v562 = vadd.f32 0.0, %v561
        %v563 = vpop.f32.mrb[0].mxu0
        %v564 = vpop.f32.mrb[0].mxu0
        %v565 = vadd.f32 0.0, %v564
        %v566 = vpop.f32.mrb[0].mxu0
        %567 = vmatprep.mubr.bf16.mxu0 0
        %568 = vmatmul.mubr.bf16.gmra.mrb[0].mxu0 %v479
        %v569 = vpop.f32.mrb[0].mxu0
        %v570 = vadd.f32 0.0, %v569
        %v571 = vpop.f32.mrb[0].mxu0
        %v572 = vpop.f32.mrb[0].mxu0
        %v573 = vadd.f32 0.0, %v572
        %v574 = vpop.f32.mrb[0].mxu0
        %575 = vmatprep.mubr.bf16.mxu0 0
        %576 = vmatmul.mubr.bf16.gmra.mrb[0].mxu0 %v482
        %v577 = vpop.f32.mrb[0].mxu0
        %v578 = vadd.f32 0.0, %v577
        %v579 = vpop.f32.mrb[0].mxu0
        %v580 = vpop.f32.mrb[0].mxu0
        %v581 = vadd.f32 0.0, %v580
        %v582 = vpop.f32.mrb[0].mxu0
        %583 = vmatprep.mubr.bf16.mxu0 0
        %584 = vmatmul.mubr.bf16.gmra.mrb[0].mxu0 %v485
        %v585 = vpop.f32.mrb[0].mxu0
        %v586 = vadd.f32 0.0, %v585
        %v587 = vpop.f32.mrb[0].mxu0
        %v588 = vpop.f32.mrb[0].mxu0
        %v589 = vadd.f32 0.0, %v588
        %v590 = vpop.f32.mrb[0].mxu0
        %591 = vmatprep.mubr.bf16.mxu0 0
        %592 = vmatmul.mubr.bf16.gmra.mrb[0].mxu0 %v488
        %v593 = vpop.f32.mrb[0].mxu0
        %v594 = vadd.f32 0.0, %v593
        %v595 = vpop.f32.mrb[0].mxu0
        %v596 = vpop.f32.mrb[0].mxu0
        %v597 = vadd.f32 0.0, %v596
        %v598 = vpop.f32.mrb[0].mxu0
        %599 = vmatprep.mubr.bf16.mxu0 0
        %600 = vmatmul.mubr.bf16.gmra.mrb[0].mxu0 %v491
        %v601 = vpop.f32.mrb[0].mxu0
        %v602 = vadd.f32 0.0, %v601
        %v603 = vpop.f32.mrb[0].mxu0
        %v604 = vpop.f32.mrb[0].mxu0
        %v605 = vadd.f32 0.0, %v604
        %v606 = vpop.f32.mrb[0].mxu0
        %607 = vmatprep.mubr.bf16.mxu0 0
        %608 = vmatmul.mubr.bf16.gmra.mrb[0].mxu0 %v494
        %v609 = vpop.f32.mrb[0].mxu0
        %v610 = vadd.f32 0.0, %v609
        %v611 = vpop.f32.mrb[0].mxu0
        %v612 = vpop.f32.mrb[0].mxu0
        %v613 = vadd.f32 0.0, %v612
        %v614 = vpop.f32.mrb[0].mxu0
        %615 = vmatprep.mubr.bf16.mxu0 0
        %616 = vmatmul.mubr.bf16.gmra.mrb[0].mxu0 %v497
        %v617 = vpop.f32.mrb[0].mxu0
        %v618 = vadd.f32 0.0, %v617
        %v619 = vpop.f32.mrb[0].mxu0
        %v620 = vpop.f32.mrb[0].mxu0
        %v621 = vadd.f32 0.0, %v620
        %v622 = vpop.f32.mrb[0].mxu0
        %623 = vmatprep.mubr.bf16.mxu0 0
        %624 = vmatmul.mubr.bf16.gmra.mrb[0].mxu0 %v500
        %v625 = vpop.f32.mrb[0].mxu0
        %v626 = vadd.f32 0.0, %v625
        %v627 = vpop.f32.mrb[0].mxu0
        %v628 = vpop.f32.mrb[0].mxu0
        %v629 = vadd.f32 0.0, %v628
        %v630 = vpop.f32.mrb[0].mxu0
        %631 = vmatprep.mubr.bf16.mxu0 0
        %632 = vmatmul.mubr.bf16.gmra.mrb[0].mxu0 %v503
        %v633 = vpop.f32.mrb[0].mxu0
        %v634 = vadd.f32 0.0, %v633
        %v635 = vpop.f32.mrb[0].mxu0
        %v636 = vpop.f32.mrb[0].mxu0
        %v637 = vadd.f32 0.0, %v636
        %v638 = vpop.f32.mrb[0].mxu0
        %639 = vmatprep.mubr.bf16.mxu0 0
        %640 = vmatmul.mubr.bf16.gmra.mrb[0].mxu0 %v506
        %v641 = vpop.f32.mrb[0].mxu0
        %v642 = vadd.f32 0.0, %v641
        %v643 = vpop.f32.mrb[0].mxu0
        %v644 = vpop.f32.mrb[0].mxu0
        %v645 = vadd.f32 0.0, %v644
        %v646 = vpop.f32.mrb[0].mxu0
        %647 = vmatprep.mubr.bf16.mxu0 0
        %648 = vmatmul.mubr.bf16.gmra.mrb[0].mxu0 %v509
        %v649 = vpop.f32.mrb[0].mxu0
        %v650 = vadd.f32 0.0, %v649
        %v651 = vpop.f32.mrb[0].mxu0
        %v652 = vpop.f32.mrb[0].mxu0
        %v653 = vadd.f32 0.0, %v652
        %v654 = vpop.f32.mrb[0].mxu0
        %655 = vmatprep.mubr.bf16.mxu0 0
        %656 = vmatmul.mubr.bf16.gmra.mrb[0].mxu0 %v512
        %v657 = vpop.f32.mrb[0].mxu0
        %v658 = vadd.f32 0.0, %v657
        %v659 = vpop.f32.mrb[0].mxu0
        %v660 = vpop.f32.mrb[0].mxu0
        %v661 = vadd.f32 0.0, %v660
        %v662 = vpop.f32.mrb[0].mxu0
        %663 = vmatprep.mubr.bf16.mxu0 0
        %664 = vmatmul.mubr.bf16.gmra.mrb[0].mxu0 %v515
        %v665 = vpop.f32.mrb[0].mxu0
        %v666 = vadd.f32 0.0, %v665
        %v667 = vpop.f32.mrb[0].mxu0
        %v668 = vpop.f32.mrb[0].mxu0
        %v669 = vadd.f32 0.0, %v668
        %v670 = vpop.f32.mrb[0].mxu0
        %671 = vmatprep.mubr.bf16.mxu0 0
        %672 = vmatmul.mubr.bf16.gmra.mrb[0].mxu0 %v518
        %v673 = vpop.f32.mrb[0].mxu0
        %v674 = vadd.f32 0.0, %v673
        %v675 = vpop.f32.mrb[0].mxu0
        %v676 = vpop.f32.mrb[0].mxu0
        %v677 = vadd.f32 0.0, %v676
        %v678 = vpop.f32.mrb[0].mxu0
        %679 = vmatprep.mubr.bf16.mxu0 0
        %680 = vmatmul.mubr.bf16.gmra.mrb[0].mxu0 %v521
        %v681 = vpop.f32.mrb[0].mxu0
        %v682 = vadd.f32 0.0, %v681
        %v683 = vpop.f32.mrb[0].mxu0
        %v684 = vpop.f32.mrb[0].mxu0
        %v685 = vadd.f32 0.0, %v684
        %v686 = vpop.f32.mrb[0].mxu0
        %687 = vdwg.mxu0
        %v688 = vadd.f32 %v310, %v562
        %v689 = vadd.f32 %v311, %v565
        %v690 = vadd.f32 %v312, %v570
        %v691 = vadd.f32 %v313, %v573
        %v692 = vadd.f32 %v314, %v578
        %v693 = vadd.f32 %v315, %v581
        %v694 = vadd.f32 %v316, %v586
        %v695 = vadd.f32 %v317, %v589
        %v696 = vadd.f32 %v318, %v594
        %v697 = vadd.f32 %v319, %v597
        %v698 = vadd.f32 %v320, %v602
        %v699 = vadd.f32 %v321, %v605
        %v700 = vadd.f32 %v322, %v610
        %v701 = vadd.f32 %v323, %v613
        %v702 = vadd.f32 %v324, %v618
        %v703 = vadd.f32 %v325, %v621
        %v704 = vadd.f32 %v326, %v626
        %v705 = vadd.f32 %v327, %v629
        %v706 = vadd.f32 %v328, %v634
        %v707 = vadd.f32 %v329, %v637
        %v708 = vadd.f32 %v330, %v642
        %v709 = vadd.f32 %v331, %v645
        %v710 = vadd.f32 %v332, %v650
        %v711 = vadd.f32 %v333, %v653
        %v712 = vadd.f32 %v334, %v658
        %v713 = vadd.f32 %v335, %v661
        %v714 = vadd.f32 %v336, %v666
        %v715 = vadd.f32 %v337, %v669
        %v716 = vadd.f32 %v338, %v674
        %v717 = vadd.f32 %v339, %v677
        %v718 = vadd.f32 %v340, %v682
        %v719 = vadd.f32 %v341, %v685
        %720 = vst [vmem:[#allocation2] sm:$0xff] %v688
        %721 = vst [vmem:[#allocation2 + $0x8] sm:$0xff] %v689
        %722 = vst [vmem:[#allocation2 + $0x10] sm:$0xff] %v690
        %723 = vst [vmem:[#allocation2 + $0x18] sm:$0xff] %v691
        %724 = vst [vmem:[#allocation2 + $0x20] sm:$0xff] %v692
        %725 = vst [vmem:[#allocation2 + $0x28] sm:$0xff] %v693
        %726 = vst [vmem:[#allocation2 + $0x30] sm:$0xff] %v694
        %727 = vst [vmem:[#allocation2 + $0x38] sm:$0xff] %v695
        %728 = vst [vmem:[#allocation2 + $0x40] sm:$0xff] %v696
        %729 = vst [vmem:[#allocation2 + $0x48] sm:$0xff] %v697
        %730 = vst [vmem:[#allocation2 + $0x50] sm:$0xff] %v698
        %731 = vst [vmem:[#allocation2 + $0x58] sm:$0xff] %v699
        %732 = vst [vmem:[#allocation2 + $0x60] sm:$0xff] %v700
        %733 = vst [vmem:[#allocation2 + $0x68] sm:$0xff] %v701
        %734 = vst [vmem:[#allocation2 + $0x70] sm:$0xff] %v702
        %735 = vst [vmem:[#allocation2 + $0x78] sm:$0xff] %v703
        %736 = vst [vmem:[#allocation2 + $0x80] sm:$0xff] %v704
        %737 = vst [vmem:[#allocation2 + $0x88] sm:$0xff] %v705
        %738 = vst [vmem:[#allocation2 + $0x90] sm:$0xff] %v706
        %739 = vst [vmem:[#allocation2 + $0x98] sm:$0xff] %v707
        %740 = vst [vmem:[#allocation2 + $0xa0] sm:$0xff] %v708
        %741 = vst [vmem:[#allocation2 + $0xa8] sm:$0xff] %v709
        %742 = vst [vmem:[#allocation2 + $0xb0] sm:$0xff] %v710
        %743 = vst [vmem:[#allocation2 + $0xb8] sm:$0xff] %v711
        %744 = vst [vmem:[#allocation2 + $0xc0] sm:$0xff] %v712
        %745 = vst [vmem:[#allocation2 + $0xc8] sm:$0xff] %v713
        %746 = vst [vmem:[#allocation2 + $0xd0] sm:$0xff] %v714
        %747 = vst [vmem:[#allocation2 + $0xd8] sm:$0xff] %v715
        %748 = vst [vmem:[#allocation2 + $0xe0] sm:$0xff] %v716
        %749 = vst [vmem:[#allocation2 + $0xe8] sm:$0xff] %v717
        %750 = vst [vmem:[#allocation2 + $0xf0] sm:$0xff] %v718
        %751 = vst [vmem:[#allocation2 + $0xf8] sm:$0xff] %v719
        // Predicated region
        $region41: #{tpu_custom_call.1} parent=27 // pred_check
          %p752 = pneg %p274
        $region42: #{tpu_custom_call.1} parent=27 // pred_check_branch
          %754 = sbr.rel (%p752) target = $region44
        $region43: #{tpu_custom_call.1} parent=27 // pred_region
          %v755 = vld [vmem:[#allocation2] sm:$0xff]
          %v756 = vld [vmem:[#allocation2 + $0x8] sm:$0xff]
          %v757 = vld [vmem:[#allocation2 + $0x10] sm:$0xff]
          %v758 = vld [vmem:[#allocation2 + $0x18] sm:$0xff]
          %v759 = vld [vmem:[#allocation2 + $0x20] sm:$0xff]
          %v760 = vld [vmem:[#allocation2 + $0x28] sm:$0xff]
          %v761 = vld [vmem:[#allocation2 + $0x30] sm:$0xff]
          %v762 = vld [vmem:[#allocation2 + $0x38] sm:$0xff]
          %v763 = vld [vmem:[#allocation2 + $0x40] sm:$0xff]
          %v764 = vld [vmem:[#allocation2 + $0x48] sm:$0xff]
          %v765 = vld [vmem:[#allocation2 + $0x50] sm:$0xff]
          %v766 = vld [vmem:[#allocation2 + $0x58] sm:$0xff]
          %v767 = vld [vmem:[#allocation2 + $0x60] sm:$0xff]
          %v768 = vld [vmem:[#allocation2 + $0x68] sm:$0xff]
          %v769 = vld [vmem:[#allocation2 + $0x70] sm:$0xff]
          %v770 = vld [vmem:[#allocation2 + $0x78] sm:$0xff]
          %v771 = vld [vmem:[#allocation2 + $0x80] sm:$0xff]
          %v772 = vld [vmem:[#allocation2 + $0x88] sm:$0xff]
          %v773 = vld [vmem:[#allocation2 + $0x90] sm:$0xff]
          %v774 = vld [vmem:[#allocation2 + $0x98] sm:$0xff]
          %v775 = vld [vmem:[#allocation2 + $0xa0] sm:$0xff]
          %v776 = vld [vmem:[#allocation2 + $0xa8] sm:$0xff]
          %v777 = vld [vmem:[#allocation2 + $0xb0] sm:$0xff]
          %v778 = vld [vmem:[#allocation2 + $0xb8] sm:$0xff]
          %v779 = vld [vmem:[#allocation2 + $0xc0] sm:$0xff]
          %v780 = vld [vmem:[#allocation2 + $0xc8] sm:$0xff]
          %v781 = vld [vmem:[#allocation2 + $0xd0] sm:$0xff]
          %v782 = vld [vmem:[#allocation2 + $0xd8] sm:$0xff]
          %v783 = vld [vmem:[#allocation2 + $0xe0] sm:$0xff]
          %v784 = vld [vmem:[#allocation2 + $0xe8] sm:$0xff]
          %v785 = vld [vmem:[#allocation2 + $0xf0] sm:$0xff]
          %v786 = vld [vmem:[#allocation2 + $0xf8] sm:$0xff]
          %v787 = vpack.c.bf16 %v756, %v755
          %v788 = vpack.c.bf16 %v758, %v757
          %v789 = vpack.c.bf16 %v760, %v759
          %v790 = vpack.c.bf16 %v762, %v761
          %v791 = vpack.c.bf16 %v764, %v763
          %v792 = vpack.c.bf16 %v766, %v765
          %v793 = vpack.c.bf16 %v768, %v767
          %v794 = vpack.c.bf16 %v770, %v769
          %v795 = vpack.c.bf16 %v772, %v771
          %v796 = vpack.c.bf16 %v774, %v773
          %v797 = vpack.c.bf16 %v776, %v775
          %v798 = vpack.c.bf16 %v778, %v777
          %v799 = vpack.c.bf16 %v780, %v779
          %v800 = vpack.c.bf16 %v782, %v781
          %v801 = vpack.c.bf16 %v784, %v783
          %v802 = vpack.c.bf16 %v786, %v785
          %v819 = vunpack.c.l.b16 %v787
          %v820 = vunpack.c.h.b16 %v787
          %v821 = vunpack.c.l.b16 %v788
          %v822 = vunpack.c.h.b16 %v788
          %v823 = vunpack.c.l.b16 %v789
          %v824 = vunpack.c.h.b16 %v789
          %v825 = vunpack.c.l.b16 %v790
          %v826 = vunpack.c.h.b16 %v790
          %v827 = vunpack.c.l.b16 %v791
          %v828 = vunpack.c.h.b16 %v791
          %v829 = vunpack.c.l.b16 %v792
          %v830 = vunpack.c.h.b16 %v792
          %v831 = vunpack.c.l.b16 %v793
          %v832 = vunpack.c.h.b16 %v793
          %v833 = vunpack.c.l.b16 %v794
          %v834 = vunpack.c.h.b16 %v794
          %v835 = vunpack.c.l.b16 %v795
          %v836 = vunpack.c.h.b16 %v795
          %v837 = vunpack.c.l.b16 %v796
          %v838 = vunpack.c.h.b16 %v796
          %v839 = vunpack.c.l.b16 %v797
          %v840 = vunpack.c.h.b16 %v797
          %v841 = vunpack.c.l.b16 %v798
          %v842 = vunpack.c.h.b16 %v798
          %v843 = vunpack.c.l.b16 %v799
          %v844 = vunpack.c.h.b16 %v799
          %v845 = vunpack.c.l.b16 %v800
          %v846 = vunpack.c.h.b16 %v800
          %v847 = vunpack.c.l.b16 %v801
          %v848 = vunpack.c.h.b16 %v801
          %v849 = vunpack.c.l.b16 %v802
          %v850 = vunpack.c.h.b16 %v802
          %v851 = vpack.c.b16 %v819, %v819
          %v852 = vpack.c.b16 %v820, %v820
          %v853 = vpack.c.b16 %v821, %v821
          %v854 = vpack.c.b16 %v822, %v822
          %v855 = vpack.c.b16 %v823, %v823
          %v856 = vpack.c.b16 %v824, %v824
          %v857 = vpack.c.b16 %v825, %v825
          %v858 = vpack.c.b16 %v826, %v826
          %v859 = vpack.c.b16 %v827, %v827
          %v860 = vpack.c.b16 %v828, %v828
          %v861 = vpack.c.b16 %v829, %v829
          %v862 = vpack.c.b16 %v830, %v830
          %v863 = vpack.c.b16 %v831, %v831
          %v864 = vpack.c.b16 %v832, %v832
          %v865 = vpack.c.b16 %v833, %v833
          %v866 = vpack.c.b16 %v834, %v834
          %v867 = vpack.c.b16 %v835, %v835
          %v868 = vpack.c.b16 %v836, %v836
          %v869 = vpack.c.b16 %v837, %v837
          %v870 = vpack.c.b16 %v838, %v838
          %v871 = vpack.c.b16 %v839, %v839
          %v872 = vpack.c.b16 %v840, %v840
          %v873 = vpack.c.b16 %v841, %v841
          %v874 = vpack.c.b16 %v842, %v842
          %v875 = vpack.c.b16 %v843, %v843
          %v876 = vpack.c.b16 %v844, %v844
          %v877 = vpack.c.b16 %v845, %v845
          %v878 = vpack.c.b16 %v846, %v846
          %v879 = vpack.c.b16 %v847, %v847
          %v880 = vpack.c.b16 %v848, %v848
          %v881 = vpack.c.b16 %v849, %v849
          %v882 = vpack.c.b16 %v850, %v850
          %915 = vst [vmem:[%s257] sm:$0xf] %v851
          %916 = vst [vmem:[%s257 + $0x4] sm:$0xf] %v852
          %917 = vst [vmem:[%s257 + $0x8] sm:$0xf] %v853
          %918 = vst [vmem:[%s257 + $0xc] sm:$0xf] %v854
          %919 = vst [vmem:[%s257 + $0x10] sm:$0xf] %v855
          %920 = vst [vmem:[%s257 + $0x14] sm:$0xf] %v856
          %921 = vst [vmem:[%s257 + $0x18] sm:$0xf] %v857
          %922 = vst [vmem:[%s257 + $0x1c] sm:$0xf] %v858
          %923 = vst [vmem:[%s257 + $0x20] sm:$0xf] %v859
          %924 = vst [vmem:[%s257 + $0x24] sm:$0xf] %v860
          %925 = vst [vmem:[%s257 + $0x28] sm:$0xf] %v861
          %926 = vst [vmem:[%s257 + $0x2c] sm:$0xf] %v862
          %927 = vst [vmem:[%s257 + $0x30] sm:$0xf] %v863
          %928 = vst [vmem:[%s257 + $0x34] sm:$0xf] %v864
          %929 = vst [vmem:[%s257 + $0x38] sm:$0xf] %v865
          %930 = vst [vmem:[%s257 + $0x3c] sm:$0xf] %v866
          %931 = vst [vmem:[%s257 + $0x40] sm:$0xf] %v867
          %932 = vst [vmem:[%s257 + $0x44] sm:$0xf] %v868
          %933 = vst [vmem:[%s257 + $0x48] sm:$0xf] %v869
          %934 = vst [vmem:[%s257 + $0x4c] sm:$0xf] %v870
          %935 = vst [vmem:[%s257 + $0x50] sm:$0xf] %v871
          %936 = vst [vmem:[%s257 + $0x54] sm:$0xf] %v872
          %937 = vst [vmem:[%s257 + $0x58] sm:$0xf] %v873
          %938 = vst [vmem:[%s257 + $0x5c] sm:$0xf] %v874
          %939 = vst [vmem:[%s257 + $0x60] sm:$0xf] %v875
          %940 = vst [vmem:[%s257 + $0x64] sm:$0xf] %v876
          %941 = vst [vmem:[%s257 + $0x68] sm:$0xf] %v877
          %942 = vst [vmem:[%s257 + $0x6c] sm:$0xf] %v878
          %943 = vst [vmem:[%s257 + $0x70] sm:$0xf] %v879
          %944 = vst [vmem:[%s257 + $0x74] sm:$0xf] %v880
          %945 = vst [vmem:[%s257 + $0x78] sm:$0xf] %v881
          %946 = vst [vmem:[%s257 + $0x7c] sm:$0xf] %v882
          %v947 = vadd.f32 %v755, %v756
          %v948 = vadd.f32 %v947, %v757
          %v949 = vadd.f32 %v948, %v758
          %v950 = vadd.f32 %v949, %v759
          %v951 = vadd.f32 %v950, %v760
          %v952 = vadd.f32 %v951, %v761
          %v953 = vadd.f32 %v952, %v762
          %v954 = vadd.f32 %v953, %v763
          %v955 = vadd.f32 %v954, %v764
          %v956 = vadd.f32 %v955, %v765
          %v957 = vadd.f32 %v956, %v766
          %v958 = vadd.f32 %v957, %v767
          %v959 = vadd.f32 %v958, %v768
          %v960 = vadd.f32 %v959, %v769
          %v961 = vadd.f32 %v960, %v770
          %v962 = vadd.f32 %v961, %v771
          %v963 = vadd.f32 %v962, %v772
          %v964 = vadd.f32 %v963, %v773
          %v965 = vadd.f32 %v964, %v774
          %v966 = vadd.f32 %v965, %v775
          %v967 = vadd.f32 %v966, %v776
          %v968 = vadd.f32 %v967, %v777
          %v969 = vadd.f32 %v968, %v778
          %v970 = vadd.f32 %v969, %v779
          %v971 = vadd.f32 %v970, %v780
          %v972 = vadd.f32 %v971, %v781
          %v973 = vadd.f32 %v972, %v782
          %v974 = vadd.f32 %v973, %v783
          %v975 = vadd.f32 %v974, %v784
          %v976 = vadd.f32 %v975, %v785
          %v977 = vadd.f32 %v976, %v786
          %v978 = vrot.slane %v977, 4
          %v979 = vadd.f32 %v977, %v978
          %v980 = vrot.slane %v979, 2
          %v981 = vadd.f32 %v979, %v980
          %v982 = vrot.slane %v981, 1
          %v983 = vadd.f32 %v981, %v982
          %984 = vst [vmem:[%s263] sm:$0x1] %v983
          %v985 = vmul.f32 %v755, %v755
          %v986 = vmul.f32 %v756, %v756
          %v987 = vmul.f32 %v757, %v757
          %v988 = vmul.f32 %v758, %v758
          %v989 = vmul.f32 %v759, %v759
          %v990 = vmul.f32 %v760, %v760
          %v991 = vmul.f32 %v761, %v761
          %v992 = vmul.f32 %v762, %v762
          %v993 = vmul.f32 %v763, %v763
          %v994 = vmul.f32 %v764, %v764
          %v995 = vmul.f32 %v765, %v765
          %v996 = vmul.f32 %v766, %v766
          %v997 = vmul.f32 %v767, %v767
          %v998 = vmul.f32 %v768, %v768
          %v999 = vmul.f32 %v769, %v769
          %v1000 = vmul.f32 %v770, %v770
          %v1001 = vmul.f32 %v771, %v771
          %v1002 = vmul.f32 %v772, %v772
          %v1003 = vmul.f32 %v773, %v773
          %v1004 = vmul.f32 %v774, %v774
          %v1005 = vmul.f32 %v775, %v775
          %v1006 = vmul.f32 %v776, %v776
          %v1007 = vmul.f32 %v777, %v777
          %v1008 = vmul.f32 %v778, %v778
          %v1009 = vmul.f32 %v779, %v779
          %v1010 = vmul.f32 %v780, %v780
          %v1011 = vmul.f32 %v781, %v781
          %v1012 = vmul.f32 %v782, %v782
          %v1013 = vmul.f32 %v783, %v783
          %v1014 = vmul.f32 %v784, %v784
          %v1015 = vmul.f32 %v785, %v785
          %v1016 = vmul.f32 %v786, %v786
          %v1017 = vadd.f32 %v985, %v986
          %v1018 = vadd.f32 %v1017, %v987
          %v1019 = vadd.f32 %v1018, %v988
          %v1020 = vadd.f32 %v1019, %v989
          %v1021 = vadd.f32 %v1020, %v990
          %v1022 = vadd.f32 %v1021, %v991
          %v1023 = vadd.f32 %v1022, %v992
          %v1024 = vadd.f32 %v1023, %v993
          %v1025 = vadd.f32 %v1024, %v994
          %v1026 = vadd.f32 %v1025, %v995
          %v1027 = vadd.f32 %v1026, %v996
          %v1028 = vadd.f32 %v1027, %v997
          %v1029 = vadd.f32 %v1028, %v998
          %v1030 = vadd.f32 %v1029, %v999
          %v1031 = vadd.f32 %v1030, %v1000
          %v1032 = vadd.f32 %v1031, %v1001
          %v1033 = vadd.f32 %v1032, %v1002
          %v1034 = vadd.f32 %v1033, %v1003
          %v1035 = vadd.f32 %v1034, %v1004
          %v1036 = vadd.f32 %v1035, %v1005
          %v1037 = vadd.f32 %v1036, %v1006
          %v1038 = vadd.f32 %v1037, %v1007
          %v1039 = vadd.f32 %v1038, %v1008
          %v1040 = vadd.f32 %v1039, %v1009
          %v1041 = vadd.f32 %v1040, %v1010
          %v1042 = vadd.f32 %v1041, %v1011
          %v1043 = vadd.f32 %v1042, %v1012
          %v1044 = vadd.f32 %v1043, %v1013
          %v1045 = vadd.f32 %v1044, %v1014
          %v1046 = vadd.f32 %v1045, %v1015
          %v1047 = vadd.f32 %v1046, %v1016
          %v1048 = vrot.slane %v1047, 4
          %v1049 = vadd.f32 %v1047, %v1048
          %v1050 = vrot.slane %v1049, 2
          %v1051 = vadd.f32 %v1049, %v1050
          %v1052 = vrot.slane %v1051, 1
          %v1053 = vadd.f32 %v1051, %v1052
          %1054 = vst [vmem:[%s269] sm:$0x1] %v1053
        $region44: #{tpu_custom_call.1} parent=27 // pred_fallthru
          _
        %s1055 = sand.u32 %s100, 1
        %s1056 = scalar_lea.sflag [#allocation5], %s1055
        %s1057 = sand.u32 %s100, 1
        %s1058 = smul.addr %s1057, 128
        %s1059 = scalar_lea.vmem [#allocation8], %s1058
        %s1060 = sand.u32 %s26, 1
        %s1061 = scalar_lea.sflag [#allocation10], %s1060
        %s1062 = sand.u32 %s126, 1
        %s1063 = scalar_lea.vmem [#allocation9], %s1062
        %s1064 = sand.u32 %s26, 1
        %s1065 = scalar_lea.sflag [#allocation10], %s1064
        %s1066 = sand.u32 %s152, 1
        %s1067 = scalar_lea.vmem [#allocation11], %s1066
        // Predicated region
        $region45: #{tpu_custom_call.1} parent=27 // pred_check
          %p1068 = pneg %p110
        $region46: #{tpu_custom_call.1} parent=27 // pred_check_branch
          %1070 = sbr.rel (%p1068) target = $region48
        $region47: #{tpu_custom_call.1} parent=27 // pred_region
          %s1071 = smul.u32 32, %s30
          %s1073 = ssub.s32 2048, 2048
          %1074 = vsyncadd %s1056, %s1073
          %s1075 = smul.addr %s1071, 64
          %s1076 = scalar_lea.hbm %s2, %s1075
          %s1077 = sshll.u32 %s1059, 4
          %s1078 = int_to_ptr.vmem [resolvable:$true] %s1077
          %1083 = dma.vmem_to_hbm [thread:$0]  %s1078, 2048, %s1076, %s1056, 64, 64, 4
        $region48: #{tpu_custom_call.1} parent=27 // pred_fallthru
          _
        // Predicated region
        $region49: #{tpu_custom_call.1} parent=27 // pred_check
          %p1084 = pneg %p136
        $region50: #{tpu_custom_call.1} parent=27 // pred_check_branch
          %1086 = sbr.rel (%p1084) target = $region52
        $region51: #{tpu_custom_call.1} parent=27 // pred_region
          %s1088 = ssub.s32 16, 16
          %1089 = vsyncadd %s1061, %s1088
          %s1090 = smul.addr %s30, 16
          %s1091 = scalar_lea.hbm %s3, %s1090
          %s1093 = sshll.u32 %s1063, 4
          %s1094 = int_to_ptr.vmem [resolvable:$true] %s1093
          %1096 = dma.vmem_to_hbm [thread:$0]  %s1094, 16, %s1091, %s1061
        $region52: #{tpu_custom_call.1} parent=27 // pred_fallthru
          _
        // Predicated region
        $region53: #{tpu_custom_call.1} parent=27 // pred_check
          %p1097 = pneg %p162
        $region54: #{tpu_custom_call.1} parent=27 // pred_check_branch
          %1099 = sbr.rel (%p1097) target = $region56
        $region55: #{tpu_custom_call.1} parent=27 // pred_region
          %s1101 = ssub.s32 16, 16
          %1102 = vsyncadd %s1065, %s1101
          %s1103 = smul.addr %s30, 16
          %s1104 = scalar_lea.hbm %s4, %s1103
          %s1106 = sshll.u32 %s1067, 4
          %s1107 = int_to_ptr.vmem [resolvable:$true] %s1106
          %1109 = dma.vmem_to_hbm [thread:$0]  %s1107, 16, %s1104, %s1065
        $region56: #{tpu_custom_call.1} parent=27 // pred_fallthru
          _
      $region28: #{tpu_custom_call.1} parent=5 // pred_fallthru
        _
      %p1110 = scmp.le.s32.totalorder 2, %s21
      // Predicated region
      $region57: #{tpu_custom_call.1} parent=5 // pred_check
        %p1111 = pneg %p1110
      $region58: #{tpu_custom_call.1} parent=5 // pred_check_branch
        %1113 = sbr.rel (%p1111) target = $region60
      $region59: #{tpu_custom_call.1} parent=5 // pred_region
        %s1114 = ssub.s32 %s21, 2
        // Predicated region
        $region61: #{tpu_custom_call.1} parent=59 // pred_check
          %p1115 = pneg %p116
        $region62: #{tpu_custom_call.1} parent=59 // pred_check_branch
          %1117 = sbr.rel (%p1115) target = $region64
        $region63: #{tpu_custom_call.1} parent=59 // pred_region
          %s1118 = sand.u32 %s101, 1
          %s1119 = scalar_lea.sflag [#allocation5], %s1118
          %s1120 = sand.u32 %s101, 1
          %s1121 = smul.addr %s1120, 128
          %s1122 = scalar_lea.vmem [#allocation8], %s1121
          %1123 = dma.done %s1119, 2048
        $region64: #{tpu_custom_call.1} parent=59 // pred_fallthru
          _
        // Predicated region
        $region65: #{tpu_custom_call.1} parent=59 // pred_check
          %p1124 = pneg %p142
        $region66: #{tpu_custom_call.1} parent=59 // pred_check_branch
          %1126 = sbr.rel (%p1124) target = $region68
        $region67: #{tpu_custom_call.1} parent=59 // pred_region
          %s1127 = sand.u32 %s27, 1
          %s1128 = scalar_lea.sflag [#allocation10], %s1127
          %s1129 = sand.u32 %s127, 1
          %s1130 = scalar_lea.vmem [#allocation9], %s1129
          %1131 = dma.done %s1128, 16
        $region68: #{tpu_custom_call.1} parent=59 // pred_fallthru
          _
        // Predicated region
        $region69: #{tpu_custom_call.1} parent=59 // pred_check
          %p1132 = pneg %p168
        $region70: #{tpu_custom_call.1} parent=59 // pred_check_branch
          %1134 = sbr.rel (%p1132) target = $region72
        $region71: #{tpu_custom_call.1} parent=59 // pred_region
          %s1135 = sand.u32 %s27, 1
          %s1136 = scalar_lea.sflag [#allocation10], %s1135
          %s1137 = sand.u32 %s153, 1
          %s1138 = scalar_lea.vmem [#allocation11], %s1137
          %1139 = dma.done %s1136, 16
        $region72: #{tpu_custom_call.1} parent=59 // pred_fallthru
          _
      $region60: #{tpu_custom_call.1} parent=5 // pred_fallthru
        _
    $region6: #{tpu_custom_call.1} parent=1 // loop_footer
      %s25 = sadd.s32 1, %s21
    $region7: #{tpu_custom_call.1} parent=1 // loop_footer_branch
      %20 = sbr.rel target = $region3
    $region8: #{tpu_custom_call.1} parent=1 // loop_exit
      _
    %1140 = vsyncpa [#allocation4], 1
    %s1141 = scalar_lea.sflag [#allocation4], 1
    %1142 = vsyncpa %s1141, 1
    %1143 = vsyncpa [#allocation7], 1
    %1144 = vsyncpa [#allocation5], 1
    %s1145 = scalar_lea.sflag [#allocation5], 1
    %1146 = vsyncpa %s1145, 1
    %1147 = vsyncpa [#allocation10], 1
    %s1148 = scalar_lea.sflag [#allocation10], 1
    %1149 = vsyncpa %s1148, 1

</llo_original>
